<compile_context>
chip_gen: v6e
topology: v6e:2x2x1
jax: 0.10.0
libtpu: 0.0.40
codegen_flags: <defaults>
</compile_context>

<pallas_src>
import jax
import jax.numpy as jnp
from jax.experimental import pallas as pl
from jax.experimental.pallas import tpu as pltpu

VERY_NEGATIVE_NUMBER = -1e30


def _round_up(x, m):
    return (x + m - 1) // m * m


def _dag_attention_kernel(leaves_ref, anc_ref, mask_ref,
                          wl_ref, wa_ref, b1_ref, w2b_ref,
                          expand_ref, fold_ref, out_ref):
    # Block shapes (per grid step), with BN nodes per block:
    #   leaves_ref, anc_ref : (BN, L*D)   lane-dense node rows
    #   mask_ref            : (BN, L)
    #   wl_ref, wa_ref      : (L*D, L*A)  block-diagonal linear1 weights
    #   b1_ref              : (1, L*A)    b1 tiled L times
    #   w2b_ref             : (L*A, L)    block-diagonal linear2 weight
    #   expand_ref          : (L, L*D)    broadcast matrix: attn(l) -> lanes of slot l
    #   fold_ref            : (L*D, D)    summation matrix: sum over the L slots
    #   out_ref             : (BN, D)
    lv = leaves_ref[...]                         # (BN, L*D)
    an = anc_ref[...]                            # (BN, L*D)
    m = mask_ref[...]                            # (BN, L)

    # linear1 (applied to concat([leaves, ancestors], -1) for every ancestor
    # slot) as two dense block-diagonal matmuls, then bias + ReLU.
    h = (jnp.dot(lv, wl_ref[...], preferred_element_type=jnp.float32)
         + jnp.dot(an, wa_ref[...], preferred_element_type=jnp.float32)
         + b1_ref[...])                          # (BN, L*A)
    h = jnp.maximum(h, 0.0)

    # linear2 -> per-slot scores, already in lane-major (BN, L) layout.
    # (b2 is omitted: adding a constant to every score cancels in the softmax.)
    scores = jnp.dot(h, w2b_ref[...], preferred_element_type=jnp.float32)  # (BN, L)

    # Masked, numerically-stable softmax over the L (ancestor) axis.
    scores = jnp.where(m > 0.0, scores, VERY_NEGATIVE_NUMBER)
    scores = scores - jnp.max(scores, axis=-1, keepdims=True)
    e = jnp.exp(scores)
    attn = e / jnp.sum(e, axis=-1, keepdims=True)            # (BN, L)
    # Fold in the `ancestors * mask` factor (also zeroes all-masked rows).
    attn = attn * m

    # (attn * ancestors * mask).sum over L, staying in the dense (BN, L*D) layout.
    w_exp = jnp.dot(attn, expand_ref[...],
                    preferred_element_type=jnp.float32)       # (BN, L*D)
    prod = an * w_exp                                         # (BN, L*D)
    out = jnp.dot(prod, fold_ref[...],
                  preferred_element_type=jnp.float32)         # (BN, D)
    out_ref[...] = out.astype(out_ref.dtype)


def dag_attention_2d(leaves, ancestors, mask, w1, b1, w2, b2=None,
                     block_n=512):
    """Pallas implementation of DAGAttention2D.forward.

    leaves, ancestors : (N, L, D)
    mask              : (N, L)   (expected {0, 1})
    w1 : (2*D, A)  (torch linear1.weight transposed)
    b1 : (A,)
    w2 : (A,)      (torch linear2.weight squeezed)
    b2 : unused (uniform shift of scores cancels in the softmax)
    """
    del b2  # cancels in the softmax; intentionally not sent to the kernel
    N, L, D = leaves.shape
    A = w1.shape[1]
    assert w1.shape == (2 * D, A)
    dtype = leaves.dtype

    # Node-block size: large enough to amortize per-step overhead, small enough
    # to stay far under the scoped VMEM limits on v5e/v6e/v7x.
    bn = min(block_n, _round_up(N, 8))
    n_pad = _round_up(N, bn)
    grid = n_pad // bn

    # Lane-dense node rows: (N, L*D). Padded rows have mask == 0 -> output 0.
    lv2 = leaves.reshape(N, L * D)
    an2 = ancestors.reshape(N, L * D)
    m2 = mask.astype(dtype)
    if n_pad != N:
        pad = n_pad - N
        lv2 = jnp.pad(lv2, ((0, pad), (0, 0)))
        an2 = jnp.pad(an2, ((0, pad), (0, 0)))
        m2 = jnp.pad(m2, ((0, pad), (0, 0)))

    # Block-diagonal weights so one matmul handles all L ancestor slots.
    eye_l = jnp.eye(L, dtype=dtype)
    wl_big = jnp.kron(eye_l, w1[:D].astype(dtype))            # (L*D, L*A)
    wa_big = jnp.kron(eye_l, w1[D:].astype(dtype))            # (L*D, L*A)
    w2_big = jnp.kron(eye_l, w2.reshape(A, 1).astype(dtype))  # (L*A, L)
    b1_t = jnp.tile(b1.astype(dtype), L).reshape(1, L * A)    # (1, L*A)

    # Constant 0/1 matrices for the lane-dense attention-weighted reduction.
    ld = jnp.arange(L * D)
    expand = (ld[None, :] // D == jnp.arange(L)[:, None]).astype(dtype)  # (L, L*D)
    fold = (ld[:, None] % D == jnp.arange(D)[None, :]).astype(dtype)     # (L*D, D)

    out = pl.pallas_call(
        _dag_attention_kernel,
        out_shape=jax.ShapeDtypeStruct((n_pad, D), dtype),
        grid_spec=pltpu.PrefetchScalarGridSpec(
            num_scalar_prefetch=0,
            grid=(grid,),
            in_specs=[
                pl.BlockSpec((bn, L * D), lambda i: (i, 0)),      # leaves
                pl.BlockSpec((bn, L * D), lambda i: (i, 0)),      # ancestors
                pl.BlockSpec((bn, L), lambda i: (i, 0)),          # mask
                pl.BlockSpec((L * D, L * A), lambda i: (0, 0)),   # w1 (leaves part)
                pl.BlockSpec((L * D, L * A), lambda i: (0, 0)),   # w1 (ancestors part)
                pl.BlockSpec((1, L * A), lambda i: (0, 0)),       # b1 tiled
                pl.BlockSpec((L * A, L), lambda i: (0, 0)),       # w2 block-diag
                pl.BlockSpec((L, L * D), lambda i: (0, 0)),       # expand matrix
                pl.BlockSpec((L * D, D), lambda i: (0, 0)),       # fold matrix
            ],
            out_specs=pl.BlockSpec((bn, D), lambda i: (i, 0)),
        ),
        compiler_params=pltpu.CompilerParams(
            dimension_semantics=("parallel",)),
    )(lv2, an2, m2, wl_big, wa_big, b1_t, w2_big, expand, fold)
    return out[:N]


def dag_attention_2d_ref(leaves, ancestors, mask, w1, b1, w2, b2):
    """Pure-JAX reference mirroring the PyTorch forward exactly."""
    m = mask[:, :, None].astype(leaves.dtype)
    x = jnp.concatenate([leaves * m, ancestors * m], axis=-1)
    x = x @ w1 + b1                                   # linear1
    x = jnp.maximum(x, 0.0)                           # relu
    x = x @ w2[:, None] + b2[0]                       # linear2 -> (N, L, 1)
    x = x + (1.0 - m) * VERY_NEGATIVE_NUMBER
    x = jax.nn.softmax(x, axis=1)
    return jnp.sum(x * ancestors * m, axis=1)


if __name__ == "__main__":
    # Small shapes consistent with the module: D=16 per-tensor embedding,
    # in_features = 2*D = 32 (concat of leaves/ancestors), attention_dim = 32.
    N, L, D, A = 16, 8, 16, 32

    key = jax.random.PRNGKey(0)
    k_lv, k_an, k_mk, k_w1, k_b1, k_w2, k_b2 = jax.random.split(key, 7)

    leaves = jax.random.normal(k_lv, (N, L, D), dtype=jnp.float32)
    ancestors = jax.random.normal(k_an, (N, L, D), dtype=jnp.float32)
    mask = (jax.random.uniform(k_mk, (N, L)) > 0.3).astype(jnp.float32)
    mask = mask.at[:, 0].set(1.0)  # guarantee at least one valid ancestor

    # torch Linear weights stored transposed: (in, out).
    w1 = jax.random.normal(k_w1, (2 * D, A), dtype=jnp.float32) * 0.1
    b1 = jax.random.normal(k_b1, (A,), dtype=jnp.float32) * 0.1
    w2 = jax.random.normal(k_w2, (A,), dtype=jnp.float32) * 0.1
    b2 = jax.random.normal(k_b2, (1,), dtype=jnp.float32) * 0.1

    out = dag_attention_2d(leaves, ancestors, mask, w1, b1, w2, b2)
    out = jax.block_until_ready(out)

    ref = dag_attention_2d_ref(leaves, ancestors, mask, w1, b1, w2, b2)
    ref = jax.block_until_ready(ref)

    assert out.shape == (N, D)
    assert jnp.allclose(out, ref, atol=1e-5, rtol=1e-5), (
        f"max abs err = {jnp.max(jnp.abs(out - ref))}")

    print("KERNEL_OK")
</pallas_src>

<mosaic_0001>
module attributes {stable_mosaic.version = 11 : i64} {
  func.func @_dag_attention_kernel(%arg0: i32, %arg1: memref<16x128xf32, #tpu.memory_space<vmem>>, %arg2: memref<16x128xf32, #tpu.memory_space<vmem>>, %arg3: memref<16x8xf32, #tpu.memory_space<vmem>>, %arg4: memref<128x256xf32, #tpu.memory_space<vmem>>, %arg5: memref<128x256xf32, #tpu.memory_space<vmem>>, %arg6: memref<1x256xf32, #tpu.memory_space<vmem>>, %arg7: memref<256x8xf32, #tpu.memory_space<vmem>>, %arg8: memref<8x128xf32, #tpu.memory_space<vmem>>, %arg9: memref<128x16xf32, #tpu.memory_space<vmem>>, %arg10: memref<16x16xf32, #tpu.memory_space<vmem>>) attributes {dimension_semantics = [#tpu.dimension_semantics<parallel>], iteration_bounds = array<i64: 1>, scalar_prefetch = 0 : i64, scratch_operands = 0 : i64, tpu.core_type = #tpu.core_type<tc>, window_params = [{transform_indices = @transform_0, window_bounds = array<i64: 16, 128>}, {transform_indices = @transform_1, window_bounds = array<i64: 16, 128>}, {transform_indices = @transform_2, window_bounds = array<i64: 16, 8>}, {pipeline_mode = #tpu.pipeline_mode<synchronous>, transform_indices = @transform_3, window_bounds = array<i64: 128, 256>}, {pipeline_mode = #tpu.pipeline_mode<synchronous>, transform_indices = @transform_4, window_bounds = array<i64: 128, 256>}, {pipeline_mode = #tpu.pipeline_mode<synchronous>, transform_indices = @transform_5, window_bounds = array<i64: 1, 256>}, {pipeline_mode = #tpu.pipeline_mode<synchronous>, transform_indices = @transform_6, window_bounds = array<i64: 256, 8>}, {pipeline_mode = #tpu.pipeline_mode<synchronous>, transform_indices = @transform_7, window_bounds = array<i64: 8, 128>}, {pipeline_mode = #tpu.pipeline_mode<synchronous>, transform_indices = @transform_8, window_bounds = array<i64: 128, 16>}, {transform_indices = @transform_9, window_bounds = array<i64: 16, 16>}]} {
    %c0 = arith.constant 0 : index
    %c0_0 = arith.constant 0 : index
    %0 = vector.load %arg1[%c0, %c0_0] : memref<16x128xf32, #tpu.memory_space<vmem>>, vector<16x128xf32>
    %c0_1 = arith.constant 0 : index
    %c0_2 = arith.constant 0 : index
    %1 = vector.load %arg2[%c0_1, %c0_2] : memref<16x128xf32, #tpu.memory_space<vmem>>, vector<16x128xf32>
    %c0_3 = arith.constant 0 : index
    %c0_4 = arith.constant 0 : index
    %2 = vector.load %arg3[%c0_3, %c0_4] : memref<16x8xf32, #tpu.memory_space<vmem>>, vector<16x8xf32>
    %c0_5 = arith.constant 0 : index
    %c0_6 = arith.constant 0 : index
    %3 = vector.load %arg4[%c0_5, %c0_6] : memref<128x256xf32, #tpu.memory_space<vmem>>, vector<128x256xf32>
    %cst = arith.constant dense<0.000000e+00> : vector<16x256xf32>
    %4 = tpu.matmul %0, %3, %cst {dimension_numbers = #tpu.dot_dimension_numbers<[1], [0], [0], [1], [0, 0, 1, 1], [], []>} : vector<16x128xf32>, vector<128x256xf32>, vector<16x256xf32> -> vector<16x256xf32>
    %c0_7 = arith.constant 0 : index
    %c0_8 = arith.constant 0 : index
    %5 = vector.load %arg5[%c0_7, %c0_8] : memref<128x256xf32, #tpu.memory_space<vmem>>, vector<128x256xf32>
    %cst_9 = arith.constant dense<0.000000e+00> : vector<16x256xf32>
    %6 = tpu.matmul %1, %5, %cst_9 {dimension_numbers = #tpu.dot_dimension_numbers<[1], [0], [0], [1], [0, 0, 1, 1], [], []>} : vector<16x128xf32>, vector<128x256xf32>, vector<16x256xf32> -> vector<16x256xf32>
    %7 = arith.addf %4, %6 : vector<16x256xf32>
    %c0_10 = arith.constant 0 : index
    %c0_11 = arith.constant 0 : index
    %8 = vector.load %arg6[%c0_10, %c0_11] : memref<1x256xf32, #tpu.memory_space<vmem>>, vector<1x256xf32>
    %9 = vector.broadcast %8 : vector<1x256xf32> to vector<16x256xf32>
    %10 = arith.addf %7, %9 : vector<16x256xf32>
    %cst_12 = arith.constant 0.000000e+00 : f32
    %11 = vector.broadcast %cst_12 : f32 to vector<16x256xf32>
    %12 = arith.maximumf %10, %11 : vector<16x256xf32>
    %c0_13 = arith.constant 0 : index
    %c0_14 = arith.constant 0 : index
    %13 = vector.load %arg7[%c0_13, %c0_14] : memref<256x8xf32, #tpu.memory_space<vmem>>, vector<256x8xf32>
    %cst_15 = arith.constant dense<0.000000e+00> : vector<16x8xf32>
    %14 = tpu.matmul %12, %13, %cst_15 {dimension_numbers = #tpu.dot_dimension_numbers<[1], [0], [0], [1], [0, 0, 1, 1], [], []>} : vector<16x256xf32>, vector<256x8xf32>, vector<16x8xf32> -> vector<16x8xf32>
    %cst_16 = arith.constant 0.000000e+00 : f32
    %15 = vector.broadcast %cst_16 : f32 to vector<16x8xf32>
    %16 = arith.cmpf ogt, %2, %15 : vector<16x8xf32>
    %cst_17 = arith.constant -1.000000e+30 : f32
    %17 = vector.broadcast %cst_17 : f32 to vector<16x8xf32>
    %18 = arith.select %16, %14, %17 : vector<16x8xi1>, vector<16x8xf32>
    %cst_18 = arith.constant dense<0xFF800000> : vector<16xf32>
    %19 = vector.multi_reduction <maximumf>, %18, %cst_18 [1] : vector<16x8xf32> to vector<16xf32>
    %20 = vector.shape_cast %19 : vector<16xf32> to vector<16x1xf32>
    %21 = vector.broadcast %20 : vector<16x1xf32> to vector<16x8xf32>
    %22 = arith.subf %18, %21 : vector<16x8xf32>
    %23 = math.exp %22 : vector<16x8xf32>
    %cst_19 = arith.constant dense<0.000000e+00> : vector<16xf32>
    %24 = vector.multi_reduction <add>, %23, %cst_19 [1] : vector<16x8xf32> to vector<16xf32>
    %25 = vector.shape_cast %24 : vector<16xf32> to vector<16x1xf32>
    %26 = vector.broadcast %25 : vector<16x1xf32> to vector<16x8xf32>
    %27 = arith.divf %23, %26 : vector<16x8xf32>
    %28 = arith.mulf %27, %2 : vector<16x8xf32>
    %c0_20 = arith.constant 0 : index
    %c0_21 = arith.constant 0 : index
    %29 = vector.load %arg8[%c0_20, %c0_21] : memref<8x128xf32, #tpu.memory_space<vmem>>, vector<8x128xf32>
    %cst_22 = arith.constant dense<0.000000e+00> : vector<16x128xf32>
    %30 = tpu.matmul %28, %29, %cst_22 {dimension_numbers = #tpu.dot_dimension_numbers<[1], [0], [0], [1], [0, 0, 1, 1], [], []>} : vector<16x8xf32>, vector<8x128xf32>, vector<16x128xf32> -> vector<16x128xf32>
    %31 = arith.mulf %1, %30 : vector<16x128xf32>
    %c0_23 = arith.constant 0 : index
    %c0_24 = arith.constant 0 : index
    %32 = vector.load %arg9[%c0_23, %c0_24] : memref<128x16xf32, #tpu.memory_space<vmem>>, vector<128x16xf32>
    %cst_25 = arith.constant dense<0.000000e+00> : vector<16x16xf32>
    %33 = tpu.matmul %31, %32, %cst_25 {dimension_numbers = #tpu.dot_dimension_numbers<[1], [0], [0], [1], [0, 0, 1, 1], [], []>} : vector<16x128xf32>, vector<128x16xf32>, vector<16x16xf32> -> vector<16x16xf32>
    %c0_26 = arith.constant 0 : index
    %c0_27 = arith.constant 0 : index
    %34 = vector.load %arg10[%c0_26, %c0_27] : memref<16x16xf32, #tpu.memory_space<vmem>>, vector<16x16xf32>
    tpu.vector_store %arg10[%c0_26, %c0_27], %33 {strides = array<i32>} : memref<16x16xf32, #tpu.memory_space<vmem>>, vector<16x16xf32>,
    return
  }
  func.func @transform_0(%arg0: i32) -> (i32, i32) {
    %c0_i32 = arith.constant 0 : i32
    %c0_i32_0 = arith.constant 0 : i32
    return %arg0, %c0_i32 : i32, i32
  }
  func.func @transform_1(%arg0: i32) -> (i32, i32) {
    %c0_i32 = arith.constant 0 : i32
    %c0_i32_0 = arith.constant 0 : i32
    return %arg0, %c0_i32 : i32, i32
  }
  func.func @transform_2(%arg0: i32) -> (i32, i32) {
    %c0_i32 = arith.constant 0 : i32
    %c0_i32_0 = arith.constant 0 : i32
    return %arg0, %c0_i32 : i32, i32
  }
  func.func @transform_3(%arg0: i32) -> (i32, i32) {
    %c0_i32 = arith.constant 0 : i32
    %c0_i32_0 = arith.constant 0 : i32
    %c0_i32_1 = arith.constant 0 : i32
    return %c0_i32, %c0_i32_0 : i32, i32
  }
  func.func @transform_4(%arg0: i32) -> (i32, i32) {
    %c0_i32 = arith.constant 0 : i32
    %c0_i32_0 = arith.constant 0 : i32
    %c0_i32_1 = arith.constant 0 : i32
    return %c0_i32, %c0_i32_0 : i32, i32
  }
  func.func @transform_5(%arg0: i32) -> (i32, i32) {
    %c0_i32 = arith.constant 0 : i32
    %c0_i32_0 = arith.constant 0 : i32
    %c0_i32_1 = arith.constant 0 : i32
    return %c0_i32, %c0_i32_0 : i32, i32
  }
  func.func @transform_6(%arg0: i32) -> (i32, i32) {
    %c0_i32 = arith.constant 0 : i32
    %c0_i32_0 = arith.constant 0 : i32
    %c0_i32_1 = arith.constant 0 : i32
    return %c0_i32, %c0_i32_0 : i32, i32
  }
  func.func @transform_7(%arg0: i32) -> (i32, i32) {
    %c0_i32 = arith.constant 0 : i32
    %c0_i32_0 = arith.constant 0 : i32
    %c0_i32_1 = arith.constant 0 : i32
    return %c0_i32, %c0_i32_0 : i32, i32
  }
  func.func @transform_8(%arg0: i32) -> (i32, i32) {
    %c0_i32 = arith.constant 0 : i32
    %c0_i32_0 = arith.constant 0 : i32
    %c0_i32_1 = arith.constant 0 : i32
    return %c0_i32, %c0_i32_0 : i32, i32
  }
  func.func @transform_9(%arg0: i32) -> (i32, i32) {
    %c0_i32 = arith.constant 0 : i32
    %c0_i32_0 = arith.constant 0 : i32
    return %arg0, %c0_i32 : i32, i32
  }
}

</mosaic_0001>

<llo_original>
// kernel: tpu_custom_call.1
$region0: #{tpu_custom_call.1}
  #allocation0 [shape = 'u32[]', space=smem, size = 0x4, offset = 0x4, fixed_abs, tag = 'smem constant byte address 0x4 - core index']
  #allocation1 [shape = 'u32[144,128]{1,0:T(1,128)}', space=vmem, size = 0x12000, scoped, tag = 'internal scratch']
  %s0 = inlined_call_operand.vmem [shape: f32[16,128], index: 0, kind: input, shape index: {}]
  %s1 = inlined_call_operand.vmem [shape: f32[16,128], index: 1, kind: input, shape index: {}]
  %s2 = inlined_call_operand.vmem [shape: f32[16,8], index: 2, kind: input, shape index: {}]
  %s3 = inlined_call_operand.vmem [shape: f32[128,256], index: 3, kind: input, shape index: {}]
  %s4 = inlined_call_operand.hbm [shape: f32[128,256], index: 4, kind: input, shape index: {}]
  %s5 = inlined_call_operand.vmem [shape: f32[1,256], index: 5, kind: input, shape index: {}]
  %s6 = inlined_call_operand.vmem [shape: f32[256,8], index: 6, kind: input, shape index: {}]
  %s7 = inlined_call_operand.vmem [shape: f32[8,128], index: 7, kind: input, shape index: {}]
  %s8 = inlined_call_operand.vmem [shape: f32[128,16], index: 8, kind: input, shape index: {}]
  %s9 = inlined_call_operand.hbm [shape: f32[16,16], index: 9, kind: output, shape index: {}]
  %s10 = sld [smem:[#allocation0]]
  $region50: #{tpu_custom_call.1} parent=0
    _
  %s12 = ssub.s32 1, %s10
  %s13 = scalar_select 0, %s12, %s10
  $region1: #{tpu_custom_call.1} parent=0
    #allocation2 [shape = 'u8[131072]{0}', space=vmem, size = 0x20000, scoped, tag = 'input window, operand 4, single buffered']
    #allocation3 [shape = 's32[1]{0}', space=sflag, size = 0x4, scoped, tag = 'scoped memory for tpu_custom_call.1']
    #allocation4 [shape = 's32[1]{0}', space=sflag, size = 0x4, scoped, tag = 'scoped memory for tpu_custom_call.1']
    #allocation5 [shape = 'u8[8192]{0}', space=vmem, size = 0x2000, scoped, tag = 'output window, operand 0, single buffered']
    %14 = vsyncpa [#allocation3], 0
    %15 = vsyncpa [#allocation4], 0
    // Predicated region
    $region2: #{tpu_custom_call.1} parent=1 // pred_check
      _
    $region3: #{tpu_custom_call.1} parent=1 // pred_check_branch
      %17 = sbr.rel (0) target = $region5
    $region4: #{tpu_custom_call.1} parent=1 // pred_region
      _
    $region5: #{tpu_custom_call.1} parent=1 // pred_fallthru
      _
    // Predicated region
    $region6: #{tpu_custom_call.1} parent=1 // pred_check
      _
    $region7: #{tpu_custom_call.1} parent=1 // pred_check_branch
      %19 = sbr.rel (0) target = $region9
    $region8: #{tpu_custom_call.1} parent=1 // pred_region
      _
    $region9: #{tpu_custom_call.1} parent=1 // pred_fallthru
      _
    // Predicated region
    $region10: #{tpu_custom_call.1} parent=1 // pred_check
      _
    $region11: #{tpu_custom_call.1} parent=1 // pred_check_branch
      %21 = sbr.rel (0) target = $region13
    $region12: #{tpu_custom_call.1} parent=1 // pred_region
      _
    $region13: #{tpu_custom_call.1} parent=1 // pred_fallthru
      _
    // Predicated region
    $region14: #{tpu_custom_call.1} parent=1 // pred_check
      _
    $region15: #{tpu_custom_call.1} parent=1 // pred_check_branch
      %23 = sbr.rel (0) target = $region17
    $region16: #{tpu_custom_call.1} parent=1 // pred_region
      _
    $region17: #{tpu_custom_call.1} parent=1 // pred_fallthru
      _
    // Predicated region
    $region18: #{tpu_custom_call.1} parent=1 // pred_check
      _
    $region19: #{tpu_custom_call.1} parent=1 // pred_check_branch
      %25 = sbr.rel (0) target = $region21
    $region20: #{tpu_custom_call.1} parent=1 // pred_region
      %s27 = ssub.s32 4096, 4096
      %28 = vsyncadd [#allocation3], %s27
      %s29 = sshll.u32 [#allocation2], 4
      %s30 = int_to_ptr.vmem [resolvable:$true] %s29
      %35 = dma.hbm_to_vmem [thread:$0]  %s4, 4096, %s30, [#allocation3], 256, 256, 16
    $region21: #{tpu_custom_call.1} parent=1 // pred_fallthru
      _
    // Predicated region
    $region22: #{tpu_custom_call.1} parent=1 // pred_check
      _
    $region23: #{tpu_custom_call.1} parent=1 // pred_check_branch
      %37 = sbr.rel (0) target = $region25
    $region24: #{tpu_custom_call.1} parent=1 // pred_region
      _
    $region25: #{tpu_custom_call.1} parent=1 // pred_fallthru
      _
    // Predicated region
    $region26: #{tpu_custom_call.1} parent=1 // pred_check
      _
    $region27: #{tpu_custom_call.1} parent=1 // pred_check_branch
      %39 = sbr.rel (0) target = $region29
    $region28: #{tpu_custom_call.1} parent=1 // pred_region
      _
    $region29: #{tpu_custom_call.1} parent=1 // pred_fallthru
      _
    // Predicated region
    $region30: #{tpu_custom_call.1} parent=1 // pred_check
      _
    $region31: #{tpu_custom_call.1} parent=1 // pred_check_branch
      %41 = sbr.rel (0) target = $region33
    $region32: #{tpu_custom_call.1} parent=1 // pred_region
      _
    $region33: #{tpu_custom_call.1} parent=1 // pred_fallthru
      _
    // Predicated region
    $region34: #{tpu_custom_call.1} parent=1 // pred_check
      _
    $region35: #{tpu_custom_call.1} parent=1 // pred_check_branch
      %43 = sbr.rel (0) target = $region37
    $region36: #{tpu_custom_call.1} parent=1 // pred_region
      _
    $region37: #{tpu_custom_call.1} parent=1 // pred_fallthru
      _
    // Predicated region
    $region38: #{tpu_custom_call.1} parent=1 // pred_check
      _
    $region39: #{tpu_custom_call.1} parent=1 // pred_check_branch
      %45 = sbr.rel (0) target = $region41
    $region40: #{tpu_custom_call.1} parent=1 // pred_region
      %46 = dma.done [#allocation3], 4096
    $region41: #{tpu_custom_call.1} parent=1 // pred_fallthru
      _
    %v47 = vld [vmem:[%s0] sm:$0xff]
    %v48 = vld [vmem:[%s0 + $0x8] sm:$0xff]
    %v49 = vld [vmem:[%s1] sm:$0xff]
    %v50 = vld [vmem:[%s1 + $0x8] sm:$0xff]
    %v51 = vld [vmem:[%s2] sm:$0xff]
    %v52 = vld [vmem:[%s2 + $0x8] sm:$0xff]
    %v53 = vld [vmem:[%s3] sm:$0xff]
    %v54 = vld [vmem:[%s3 + $0x8] sm:$0xff]
    %v55 = vld [vmem:[%s3 + $0x10] sm:$0xff]
    %v56 = vld [vmem:[%s3 + $0x18] sm:$0xff]
    %v57 = vld [vmem:[%s3 + $0x20] sm:$0xff]
    %v58 = vld [vmem:[%s3 + $0x28] sm:$0xff]
    %v59 = vld [vmem:[%s3 + $0x30] sm:$0xff]
    %v60 = vld [vmem:[%s3 + $0x38] sm:$0xff]
    %v61 = vld [vmem:[%s3 + $0x40] sm:$0xff]
    %v62 = vld [vmem:[%s3 + $0x48] sm:$0xff]
    %v63 = vld [vmem:[%s3 + $0x50] sm:$0xff]
    %v64 = vld [vmem:[%s3 + $0x58] sm:$0xff]
    %v65 = vld [vmem:[%s3 + $0x60] sm:$0xff]
    %v66 = vld [vmem:[%s3 + $0x68] sm:$0xff]
    %v67 = vld [vmem:[%s3 + $0x70] sm:$0xff]
    %v68 = vld [vmem:[%s3 + $0x78] sm:$0xff]
    %v69 = vld [vmem:[%s3 + $0x80] sm:$0xff]
    %v70 = vld [vmem:[%s3 + $0x88] sm:$0xff]
    %v71 = vld [vmem:[%s3 + $0x90] sm:$0xff]
    %v72 = vld [vmem:[%s3 + $0x98] sm:$0xff]
    %v73 = vld [vmem:[%s3 + $0xa0] sm:$0xff]
    %v74 = vld [vmem:[%s3 + $0xa8] sm:$0xff]
    %v75 = vld [vmem:[%s3 + $0xb0] sm:$0xff]
    %v76 = vld [vmem:[%s3 + $0xb8] sm:$0xff]
    %v77 = vld [vmem:[%s3 + $0xc0] sm:$0xff]
    %v78 = vld [vmem:[%s3 + $0xc8] sm:$0xff]
    %v79 = vld [vmem:[%s3 + $0xd0] sm:$0xff]
    %v80 = vld [vmem:[%s3 + $0xd8] sm:$0xff]
    %v81 = vld [vmem:[%s3 + $0xe0] sm:$0xff]
    %v82 = vld [vmem:[%s3 + $0xe8] sm:$0xff]
    %v83 = vld [vmem:[%s3 + $0xf0] sm:$0xff]
    %v84 = vld [vmem:[%s3 + $0xf8] sm:$0xff]
    %v85 = vld [vmem:[#allocation2] sm:$0xff]
    %v86 = vld [vmem:[#allocation2 + $0x8] sm:$0xff]
    %v87 = vld [vmem:[#allocation2 + $0x10] sm:$0xff]
    %v88 = vld [vmem:[#allocation2 + $0x18] sm:$0xff]
    %v89 = vld [vmem:[#allocation2 + $0x20] sm:$0xff]
    %v90 = vld [vmem:[#allocation2 + $0x28] sm:$0xff]
    %v91 = vld [vmem:[#allocation2 + $0x30] sm:$0xff]
    %v92 = vld [vmem:[#allocation2 + $0x38] sm:$0xff]
    %v93 = vld [vmem:[#allocation2 + $0x40] sm:$0xff]
    %v94 = vld [vmem:[#allocation2 + $0x48] sm:$0xff]
    %v95 = vld [vmem:[#allocation2 + $0x50] sm:$0xff]
    %v96 = vld [vmem:[#allocation2 + $0x58] sm:$0xff]
    %v97 = vld [vmem:[#allocation2 + $0x60] sm:$0xff]
    %v98 = vld [vmem:[#allocation2 + $0x68] sm:$0xff]
    %v99 = vld [vmem:[#allocation2 + $0x70] sm:$0xff]
    %v100 = vld [vmem:[#allocation2 + $0x78] sm:$0xff]
    %v101 = vld [vmem:[#allocation2 + $0x80] sm:$0xff]
    %v102 = vld [vmem:[#allocation2 + $0x88] sm:$0xff]
    %v103 = vld [vmem:[#allocation2 + $0x90] sm:$0xff]
    %v104 = vld [vmem:[#allocation2 + $0x98] sm:$0xff]
    %v105 = vld [vmem:[#allocation2 + $0xa0] sm:$0xff]
    %v106 = vld [vmem:[#allocation2 + $0xa8] sm:$0xff]
    %v107 = vld [vmem:[#allocation2 + $0xb0] sm:$0xff]
    %v108 = vld [vmem:[#allocation2 + $0xb8] sm:$0xff]
    %v109 = vld [vmem:[#allocation2 + $0xc0] sm:$0xff]
    %v110 = vld [vmem:[#allocation2 + $0xc8] sm:$0xff]
    %v111 = vld [vmem:[#allocation2 + $0xd0] sm:$0xff]
    %v112 = vld [vmem:[#allocation2 + $0xd8] sm:$0xff]
    %v113 = vld [vmem:[#allocation2 + $0xe0] sm:$0xff]
    %v114 = vld [vmem:[#allocation2 + $0xe8] sm:$0xff]
    %v115 = vld [vmem:[#allocation2 + $0xf0] sm:$0xff]
    %v116 = vld [vmem:[#allocation2 + $0xf8] sm:$0xff]
    %117 = vmatprep.subr.mxu0 %v116
    %118 = vmatpush1.msra.mxu0 %v115
    %119 = vmatprep.subr.mxu0 %v114
    %120 = vmatpush1.msra.mxu0 %v113
    %121 = vmatprep.subr.mxu0 %v112
    %122 = vmatpush1.msra.mxu0 %v111
    %123 = vmatprep.subr.mxu0 %v110
    %124 = vmatpush1.msra.mxu0 %v109
    %125 = vmatprep.subr.mxu0 %v108
    %126 = vmatpush1.msra.mxu0 %v107
    %127 = vmatprep.subr.mxu0 %v106
    %128 = vmatpush1.msra.mxu0 %v105
    %129 = vmatprep.subr.mxu0 %v104
    %130 = vmatpush1.msra.mxu0 %v103
    %131 = vmatprep.subr.mxu0 %v102
    %132 = vmatpush1.msra.mxu0 %v101
    %133 = vmatprep.subr.mxu0 %v100
    %134 = vmatpush1.msra.mxu0 %v99
    %135 = vmatprep.subr.mxu0 %v98
    %136 = vmatpush1.msra.mxu0 %v97
    %137 = vmatprep.subr.mxu0 %v96
    %138 = vmatpush1.msra.mxu0 %v95
    %139 = vmatprep.subr.mxu0 %v94
    %140 = vmatpush1.msra.mxu0 %v93
    %141 = vmatprep.subr.mxu0 %v92
    %142 = vmatpush1.msra.mxu0 %v91
    %143 = vmatprep.subr.mxu0 %v90
    %144 = vmatpush1.msra.mxu0 %v89
    %145 = vmatprep.subr.mxu0 %v88
    %146 = vmatpush1.msra.mxu0 %v87
    %147 = vmatprep.subr.mxu0 %v86
    %148 = vmatpush1.msra.mxu0 %v85
    %149 = vmatprep.subr.mxu0 0.0
    %150 = vmatpush2.msra.mxu0 0.0
    %151 = vmatprep.subr.mxu0 0.0
    %152 = vmatpush2.msra.mxu0 0.0
    %153 = vmatprep.subr.mxu0 0.0
    %154 = vmatpush2.msra.mxu0 0.0
    %155 = vmatprep.subr.mxu0 0.0
    %156 = vmatpush2.msra.mxu0 0.0
    %157 = vmatprep.subr.mxu0 0.0
    %158 = vmatpush2.msra.mxu0 0.0
    %159 = vmatprep.subr.mxu0 0.0
    %160 = vmatpush2.msra.mxu0 0.0
    %161 = vmatprep.subr.mxu0 0.0
    %162 = vmatpush2.msra.mxu0 0.0
    %163 = vmatprep.subr.mxu0 0.0
    %164 = vmatpush2.msra.mxu0 0.0
    %165 = vmatprep.subr.mxu0 0.0
    %166 = vmatpush2.msra.mxu0 0.0
    %167 = vmatprep.subr.mxu0 0.0
    %168 = vmatpush2.msra.mxu0 0.0
    %169 = vmatprep.subr.mxu0 0.0
    %170 = vmatpush2.msra.mxu0 0.0
    %171 = vmatprep.subr.mxu0 0.0
    %172 = vmatpush2.msra.mxu0 0.0
    %173 = vmatprep.subr.mxu0 0.0
    %174 = vmatpush2.msra.mxu0 0.0
    %175 = vmatprep.subr.mxu0 0.0
    %176 = vmatpush2.msra.mxu0 0.0
    %177 = vmatprep.subr.mxu0 0.0
    %178 = vmatpush2.msra.mxu0 0.0
    %179 = vmatprep.subr.mxu0 0.0
    %180 = vmatpush2.msra.mxu0 0.0
    %181 = vmatprep.mubr.f32.mxu0 0.0
    %182 = vmatmul.mubr.f32.gmra.mxu0 %v49
    %v183 = vpop.f32.mrf.mxu0
    %v184 = vadd.f32 0.0, %v183
    %v185 = vpop.f32.mrf.mxu0
    %v186 = vadd.f32 0.0, %v185
    %187 = vmatprep.mubr.f32.mxu0 0.0
    %188 = vmatmul.mubr.f32.gmra.mxu0 %v50
    %v189 = vpop.f32.mrf.mxu0
    %v190 = vadd.f32 0.0, %v189
    %v191 = vpop.f32.mrf.mxu0
    %v192 = vadd.f32 0.0, %v191
    %193 = vdwg.mxu0
    %194 = vmatprep.subr.mxu0 %v84
    %195 = vmatpush1.msra.mxu0 %v83
    %196 = vmatprep.subr.mxu0 %v82
    %197 = vmatpush1.msra.mxu0 %v81
    %198 = vmatprep.subr.mxu0 %v80
    %199 = vmatpush1.msra.mxu0 %v79
    %200 = vmatprep.subr.mxu0 %v78
    %201 = vmatpush1.msra.mxu0 %v77
    %202 = vmatprep.subr.mxu0 %v76
    %203 = vmatpush1.msra.mxu0 %v75
    %204 = vmatprep.subr.mxu0 %v74
    %205 = vmatpush1.msra.mxu0 %v73
    %206 = vmatprep.subr.mxu0 %v72
    %207 = vmatpush1.msra.mxu0 %v71
    %208 = vmatprep.subr.mxu0 %v70
    %209 = vmatpush1.msra.mxu0 %v69
    %210 = vmatprep.subr.mxu0 %v68
    %211 = vmatpush1.msra.mxu0 %v67
    %212 = vmatprep.subr.mxu0 %v66
    %213 = vmatpush1.msra.mxu0 %v65
    %214 = vmatprep.subr.mxu0 %v64
    %215 = vmatpush1.msra.mxu0 %v63
    %216 = vmatprep.subr.mxu0 %v62
    %217 = vmatpush1.msra.mxu0 %v61
    %218 = vmatprep.subr.mxu0 %v60
    %219 = vmatpush1.msra.mxu0 %v59
    %220 = vmatprep.subr.mxu0 %v58
    %221 = vmatpush1.msra.mxu0 %v57
    %222 = vmatprep.subr.mxu0 %v56
    %223 = vmatpush1.msra.mxu0 %v55
    %224 = vmatprep.subr.mxu0 %v54
    %225 = vmatpush1.msra.mxu0 %v53
    %226 = vmatprep.subr.mxu0 0.0
    %227 = vmatpush2.msra.mxu0 0.0
    %228 = vmatprep.subr.mxu0 0.0
    %229 = vmatpush2.msra.mxu0 0.0
    %230 = vmatprep.subr.mxu0 0.0
    %231 = vmatpush2.msra.mxu0 0.0
    %232 = vmatprep.subr.mxu0 0.0
    %233 = vmatpush2.msra.mxu0 0.0
    %234 = vmatprep.subr.mxu0 0.0
    %235 = vmatpush2.msra.mxu0 0.0
    %236 = vmatprep.subr.mxu0 0.0
    %237 = vmatpush2.msra.mxu0 0.0
    %238 = vmatprep.subr.mxu0 0.0
    %239 = vmatpush2.msra.mxu0 0.0
    %240 = vmatprep.subr.mxu0 0.0
    %241 = vmatpush2.msra.mxu0 0.0
    %242 = vmatprep.subr.mxu0 0.0
    %243 = vmatpush2.msra.mxu0 0.0
    %244 = vmatprep.subr.mxu0 0.0
    %245 = vmatpush2.msra.mxu0 0.0
    %246 = vmatprep.subr.mxu0 0.0
    %247 = vmatpush2.msra.mxu0 0.0
    %248 = vmatprep.subr.mxu0 0.0
    %249 = vmatpush2.msra.mxu0 0.0
    %250 = vmatprep.subr.mxu0 0.0
    %251 = vmatpush2.msra.mxu0 0.0
    %252 = vmatprep.subr.mxu0 0.0
    %253 = vmatpush2.msra.mxu0 0.0
    %254 = vmatprep.subr.mxu0 0.0
    %255 = vmatpush2.msra.mxu0 0.0
    %256 = vmatprep.subr.mxu0 0.0
    %257 = vmatpush2.msra.mxu0 0.0
    %258 = vmatprep.mubr.f32.mxu0 0.0
    %259 = vmatmul.mubr.f32.gmra.mxu0 %v47
    %v260 = vpop.f32.mrf.mxu0
    %v261 = vadd.f32 %v184, %v260
    %v262 = vpop.f32.mrf.mxu0
    %v263 = vadd.f32 %v186, %v262
    %264 = vmatprep.mubr.f32.mxu0 0.0
    %265 = vmatmul.mubr.f32.gmra.mxu0 %v48
    %v266 = vpop.f32.mrf.mxu0
    %v267 = vadd.f32 %v190, %v266
    %v268 = vpop.f32.mrf.mxu0
    %v269 = vadd.f32 %v192, %v268
    %270 = vdwg.mxu0
    %v271 = vld [vmem:[%s5] sm:$0x3]
    %v273 = vlaneseq
    %v274 = vshrl.u32 %v273, 7
    %v275 = vsub.s32 0, %v274
    %v276 = vrot.slane %v271, %v275
    %v277 = vlaneseq
    %v278 = vshrl.u32 %v277, 7
    %v279 = vsub.s32 1, %v278
    %v280 = vrot.slane %v271, %v279
    %v283 = vadd.f32 %v261, %v276
    %v284 = vadd.f32 %v263, %v280
    %v285 = vadd.f32 %v267, %v276
    %v286 = vadd.f32 %v269, %v280
    %v287 = vmax.f32 %v283, 0.0
    %v288 = vmax.f32 %v284, 0.0
    %v289 = vmax.f32 %v285, 0.0
    %v290 = vmax.f32 %v286, 0.0
    %v291 = vld [vmem:[%s6] sm:$0xff]
    %v292 = vld [vmem:[%s6 + $0x8] sm:$0xff]
    %v293 = vld [vmem:[%s6 + $0x10] sm:$0xff]
    %v294 = vld [vmem:[%s6 + $0x18] sm:$0xff]
    %v295 = vld [vmem:[%s6 + $0x20] sm:$0xff]
    %v296 = vld [vmem:[%s6 + $0x28] sm:$0xff]
    %v297 = vld [vmem:[%s6 + $0x30] sm:$0xff]
    %v298 = vld [vmem:[%s6 + $0x38] sm:$0xff]
    %v299 = vld [vmem:[%s6 + $0x40] sm:$0xff]
    %v300 = vld [vmem:[%s6 + $0x48] sm:$0xff]
    %v301 = vld [vmem:[%s6 + $0x50] sm:$0xff]
    %v302 = vld [vmem:[%s6 + $0x58] sm:$0xff]
    %v303 = vld [vmem:[%s6 + $0x60] sm:$0xff]
    %v304 = vld [vmem:[%s6 + $0x68] sm:$0xff]
    %v305 = vld [vmem:[%s6 + $0x70] sm:$0xff]
    %v306 = vld [vmem:[%s6 + $0x78] sm:$0xff]
    %v307 = vld [vmem:[%s6 + $0x80] sm:$0xff]
    %v308 = vld [vmem:[%s6 + $0x88] sm:$0xff]
    %v309 = vld [vmem:[%s6 + $0x90] sm:$0xff]
    %v310 = vld [vmem:[%s6 + $0x98] sm:$0xff]
    %v311 = vld [vmem:[%s6 + $0xa0] sm:$0xff]
    %v312 = vld [vmem:[%s6 + $0xa8] sm:$0xff]
    %v313 = vld [vmem:[%s6 + $0xb0] sm:$0xff]
    %v314 = vld [vmem:[%s6 + $0xb8] sm:$0xff]
    %v315 = vld [vmem:[%s6 + $0xc0] sm:$0xff]
    %v316 = vld [vmem:[%s6 + $0xc8] sm:$0xff]
    %v317 = vld [vmem:[%s6 + $0xd0] sm:$0xff]
    %v318 = vld [vmem:[%s6 + $0xd8] sm:$0xff]
    %v319 = vld [vmem:[%s6 + $0xe0] sm:$0xff]
    %v320 = vld [vmem:[%s6 + $0xe8] sm:$0xff]
    %v321 = vld [vmem:[%s6 + $0xf0] sm:$0xff]
    %v322 = vld [vmem:[%s6 + $0xf8] sm:$0xff]
    %323 = vmatprep.subr.mxu0 0.0
    %324 = vmatpush1.msra.mxu0 %v306
    %325 = vmatprep.subr.mxu0 0.0
    %326 = vmatpush1.msra.mxu0 %v305
    %327 = vmatprep.subr.mxu0 0.0
    %328 = vmatpush1.msra.mxu0 %v304
    %329 = vmatprep.subr.mxu0 0.0
    %330 = vmatpush1.msra.mxu0 %v303
    %331 = vmatprep.subr.mxu0 0.0
    %332 = vmatpush1.msra.mxu0 %v302
    %333 = vmatprep.subr.mxu0 0.0
    %334 = vmatpush1.msra.mxu0 %v301
    %335 = vmatprep.subr.mxu0 0.0
    %336 = vmatpush1.msra.mxu0 %v300
    %337 = vmatprep.subr.mxu0 0.0
    %338 = vmatpush1.msra.mxu0 %v299
    %339 = vmatprep.subr.mxu0 0.0
    %340 = vmatpush1.msra.mxu0 %v298
    %341 = vmatprep.subr.mxu0 0.0
    %342 = vmatpush1.msra.mxu0 %v297
    %343 = vmatprep.subr.mxu0 0.0
    %344 = vmatpush1.msra.mxu0 %v296
    %345 = vmatprep.subr.mxu0 0.0
    %346 = vmatpush1.msra.mxu0 %v295
    %347 = vmatprep.subr.mxu0 0.0
    %348 = vmatpush1.msra.mxu0 %v294
    %349 = vmatprep.subr.mxu0 0.0
    %350 = vmatpush1.msra.mxu0 %v293
    %351 = vmatprep.subr.mxu0 0.0
    %352 = vmatpush1.msra.mxu0 %v292
    %353 = vmatprep.subr.mxu0 0.0
    %354 = vmatpush1.msra.mxu0 %v291
    %355 = vmatprep.subr.mxu0 0.0
    %356 = vmatpush2.msra.mxu0 %v322
    %357 = vmatprep.subr.mxu0 0.0
    %358 = vmatpush2.msra.mxu0 %v321
    %359 = vmatprep.subr.mxu0 0.0
    %360 = vmatpush2.msra.mxu0 %v320
    %361 = vmatprep.subr.mxu0 0.0
    %362 = vmatpush2.msra.mxu0 %v319
    %363 = vmatprep.subr.mxu0 0.0
    %364 = vmatpush2.msra.mxu0 %v318
    %365 = vmatprep.subr.mxu0 0.0
    %366 = vmatpush2.msra.mxu0 %v317
    %367 = vmatprep.subr.mxu0 0.0
    %368 = vmatpush2.msra.mxu0 %v316
    %369 = vmatprep.subr.mxu0 0.0
    %370 = vmatpush2.msra.mxu0 %v315
    %371 = vmatprep.subr.mxu0 0.0
    %372 = vmatpush2.msra.mxu0 %v314
    %373 = vmatprep.subr.mxu0 0.0
    %374 = vmatpush2.msra.mxu0 %v313
    %375 = vmatprep.subr.mxu0 0.0
    %376 = vmatpush2.msra.mxu0 %v312
    %377 = vmatprep.subr.mxu0 0.0
    %378 = vmatpush2.msra.mxu0 %v311
    %379 = vmatprep.subr.mxu0 0.0
    %380 = vmatpush2.msra.mxu0 %v310
    %381 = vmatprep.subr.mxu0 0.0
    %382 = vmatpush2.msra.mxu0 %v309
    %383 = vmatprep.subr.mxu0 0.0
    %384 = vmatpush2.msra.mxu0 %v308
    %385 = vmatprep.subr.mxu0 0.0
    %386 = vmatpush2.msra.mxu0 %v307
    %387 = vmatprep.mubr.f32.mxu0 %v288
    %388 = vmatmul.mubr.f32.gmra.mxu0 %v287
    %v389 = vpop.f32.mrf.mxu0
    %v390 = vadd.f32 0.0, %v389
    %v391 = vpop.f32.mrf.mxu0
    %392 = vmatprep.mubr.f32.mxu0 %v290
    %393 = vmatmul.mubr.f32.gmra.mxu0 %v289
    %v394 = vpop.f32.mrf.mxu0
    %v395 = vadd.f32 0.0, %v394
    %v396 = vpop.f32.mrf.mxu0
    %397 = vdwg.mxu0
    %vm398 = vcmp.gt.f32.partialorder %v51, 0.0
    %vm399 = vcmp.gt.f32.partialorder %v52, 0.0
    %v400 = vsel %vm398, %v390, -1e+30
    %v401 = vsel %vm399, %v395, -1e+30
    %vm402 = vcmask 64512
    %v403 = vsel %vm402, %v400, -inf
    %404 = vmax.xlane.f32.xlu0 %v403
    %v405 = vpop.xlane.xlu0 %404
    %v406 = vsel %vm402, %v401, -inf
    %407 = vmax.xlane.f32.xlu0 %v406
    %v408 = vpop.xlane.xlu0 %407
    %v409 = vsub.f32 %v400, %v405
    %v410 = vsub.f32 %v401, %v408
    %v411 = vmul.f32 %v409, 1.442695
    %v412 = vpow.pop %v411
    %v413 = vmul.f32 %v410, 1.442695
    %v414 = vpow.pop %v413
    %v415 = vsel %vm402, %v412, 0.0
    %416 = vadd.xlane.f32.xlu0 %v415
    %v417 = vpop.xlane.xlu0 %416
    %v418 = vsel %vm402, %v414, 0.0
    %419 = vadd.xlane.f32.xlu0 %v418
    %v420 = vpop.xlane.xlu0 %419
    %v421 = vrcp.pop %v417
    %v422 = vmul.f32 %v412, %v421
    %v423 = vrcp.pop %v420
    %v424 = vmul.f32 %v414, %v423
    %v425 = vmul.f32 %v422, %v51
    %v426 = vmul.f32 %v424, %v52
    %v427 = vld [vmem:[%s7] sm:$0xff]
    %v429 = vsel %vm402, %v425, 0
    %v432 = vsel %vm402, %v426, 0
    %434 = vmatprep.subr.mxu0 0.0
    %435 = vmatpush1.msra.mxu0 0.0
    %436 = vmatprep.subr.mxu0 0.0
    %437 = vmatpush1.msra.mxu0 0.0
    %438 = vmatprep.subr.mxu0 0.0
    %439 = vmatpush1.msra.mxu0 0.0
    %440 = vmatprep.subr.mxu0 0.0
    %441 = vmatpush1.msra.mxu0 0.0
    %442 = vmatprep.subr.mxu0 0.0
    %443 = vmatpush1.msra.mxu0 0.0
    %444 = vmatprep.subr.mxu0 0.0
    %445 = vmatpush1.msra.mxu0 0.0
    %446 = vmatprep.subr.mxu0 0.0
    %447 = vmatpush1.msra.mxu0 0.0
    %448 = vmatprep.subr.mxu0 0.0
    %449 = vmatpush1.msra.mxu0 0.0
    %450 = vmatprep.subr.mxu0 0.0
    %451 = vmatpush1.msra.mxu0 0.0
    %452 = vmatprep.subr.mxu0 0.0
    %453 = vmatpush1.msra.mxu0 0.0
    %454 = vmatprep.subr.mxu0 0.0
    %455 = vmatpush1.msra.mxu0 0.0
    %456 = vmatprep.subr.mxu0 0.0
    %457 = vmatpush1.msra.mxu0 0.0
    %458 = vmatprep.subr.mxu0 0.0
    %459 = vmatpush1.msra.mxu0 0.0
    %460 = vmatprep.subr.mxu0 0.0
    %461 = vmatpush1.msra.mxu0 0.0
    %462 = vmatprep.subr.mxu0 0.0
    %463 = vmatpush1.msra.mxu0 0.0
    %464 = vmatprep.subr.mxu0 0.0
    %465 = vmatpush1.msra.mxu0 %v427
    %466 = vmatprep.subr.mxu0 0.0
    %467 = vmatpush2.msra.mxu0 0.0
    %468 = vmatprep.subr.mxu0 0.0
    %469 = vmatpush2.msra.mxu0 0.0
    %470 = vmatprep.subr.mxu0 0.0
    %471 = vmatpush2.msra.mxu0 0.0
    %472 = vmatprep.subr.mxu0 0.0
    %473 = vmatpush2.msra.mxu0 0.0
    %474 = vmatprep.subr.mxu0 0.0
    %475 = vmatpush2.msra.mxu0 0.0
    %476 = vmatprep.subr.mxu0 0.0
    %477 = vmatpush2.msra.mxu0 0.0
    %478 = vmatprep.subr.mxu0 0.0
    %479 = vmatpush2.msra.mxu0 0.0
    %480 = vmatprep.subr.mxu0 0.0
    %481 = vmatpush2.msra.mxu0 0.0
    %482 = vmatprep.subr.mxu0 0.0
    %483 = vmatpush2.msra.mxu0 0.0
    %484 = vmatprep.subr.mxu0 0.0
    %485 = vmatpush2.msra.mxu0 0.0
    %486 = vmatprep.subr.mxu0 0.0
    %487 = vmatpush2.msra.mxu0 0.0
    %488 = vmatprep.subr.mxu0 0.0
    %489 = vmatpush2.msra.mxu0 0.0
    %490 = vmatprep.subr.mxu0 0.0
    %491 = vmatpush2.msra.mxu0 0.0
    %492 = vmatprep.subr.mxu0 0.0
    %493 = vmatpush2.msra.mxu0 0.0
    %494 = vmatprep.subr.mxu0 0.0
    %495 = vmatpush2.msra.mxu0 0.0
    %496 = vmatprep.subr.mxu0 0.0
    %497 = vmatpush2.msra.mxu0 0.0
    %498 = vmatprep.mubr.f32.mxu0 0.0
    %499 = vmatmul.mubr.f32.gmra.mxu0 %v429
    %v500 = vpop.f32.mrf.mxu0
    %v501 = vadd.f32 0.0, %v500
    %v502 = vpop.f32.mrf.mxu0
    %503 = vmatprep.mubr.f32.mxu0 0.0
    %504 = vmatmul.mubr.f32.gmra.mxu0 %v432
    %v505 = vpop.f32.mrf.mxu0
    %v506 = vadd.f32 0.0, %v505
    %v507 = vpop.f32.mrf.mxu0
    %508 = vdwg.mxu0
    %v509 = vmul.f32 %v49, %v501
    %v510 = vmul.f32 %v50, %v506
    %v511 = vld [vmem:[%s8] sm:$0xff]
    %v512 = vld [vmem:[%s8 + $0x8] sm:$0xff]
    %v513 = vld [vmem:[%s8 + $0x10] sm:$0xff]
    %v514 = vld [vmem:[%s8 + $0x18] sm:$0xff]
    %v515 = vld [vmem:[%s8 + $0x20] sm:$0xff]
    %v516 = vld [vmem:[%s8 + $0x28] sm:$0xff]
    %v517 = vld [vmem:[%s8 + $0x30] sm:$0xff]
    %v518 = vld [vmem:[%s8 + $0x38] sm:$0xff]
    %v519 = vld [vmem:[%s8 + $0x40] sm:$0xff]
    %v520 = vld [vmem:[%s8 + $0x48] sm:$0xff]
    %v521 = vld [vmem:[%s8 + $0x50] sm:$0xff]
    %v522 = vld [vmem:[%s8 + $0x58] sm:$0xff]
    %v523 = vld [vmem:[%s8 + $0x60] sm:$0xff]
    %v524 = vld [vmem:[%s8 + $0x68] sm:$0xff]
    %v525 = vld [vmem:[%s8 + $0x70] sm:$0xff]
    %v526 = vld [vmem:[%s8 + $0x78] sm:$0xff]
    %527 = vmatprep.subr.mxu0 0.0
    %528 = vmatpush1.msra.mxu0 %v526
    %529 = vmatprep.subr.mxu0 0.0
    %530 = vmatpush1.msra.mxu0 %v525
    %531 = vmatprep.subr.mxu0 0.0
    %532 = vmatpush1.msra.mxu0 %v524
    %533 = vmatprep.subr.mxu0 0.0
    %534 = vmatpush1.msra.mxu0 %v523
    %535 = vmatprep.subr.mxu0 0.0
    %536 = vmatpush1.msra.mxu0 %v522
    %537 = vmatprep.subr.mxu0 0.0
    %538 = vmatpush1.msra.mxu0 %v521
    %539 = vmatprep.subr.mxu0 0.0
    %540 = vmatpush1.msra.mxu0 %v520
    %541 = vmatprep.subr.mxu0 0.0
    %542 = vmatpush1.msra.mxu0 %v519
    %543 = vmatprep.subr.mxu0 0.0
    %544 = vmatpush1.msra.mxu0 %v518
    %545 = vmatprep.subr.mxu0 0.0
    %546 = vmatpush1.msra.mxu0 %v517
    %547 = vmatprep.subr.mxu0 0.0
    %548 = vmatpush1.msra.mxu0 %v516
    %549 = vmatprep.subr.mxu0 0.0
    %550 = vmatpush1.msra.mxu0 %v515
    %551 = vmatprep.subr.mxu0 0.0
    %552 = vmatpush1.msra.mxu0 %v514
    %553 = vmatprep.subr.mxu0 0.0
    %554 = vmatpush1.msra.mxu0 %v513
    %555 = vmatprep.subr.mxu0 0.0
    %556 = vmatpush1.msra.mxu0 %v512
    %557 = vmatprep.subr.mxu0 0.0
    %558 = vmatpush1.msra.mxu0 %v511
    %559 = vmatprep.subr.mxu0 0.0
    %560 = vmatpush2.msra.mxu0 0.0
    %561 = vmatprep.subr.mxu0 0.0
    %562 = vmatpush2.msra.mxu0 0.0
    %563 = vmatprep.subr.mxu0 0.0
    %564 = vmatpush2.msra.mxu0 0.0
    %565 = vmatprep.subr.mxu0 0.0
    %566 = vmatpush2.msra.mxu0 0.0
    %567 = vmatprep.subr.mxu0 0.0
    %568 = vmatpush2.msra.mxu0 0.0
    %569 = vmatprep.subr.mxu0 0.0
    %570 = vmatpush2.msra.mxu0 0.0
    %571 = vmatprep.subr.mxu0 0.0
    %572 = vmatpush2.msra.mxu0 0.0
    %573 = vmatprep.subr.mxu0 0.0
    %574 = vmatpush2.msra.mxu0 0.0
    %575 = vmatprep.subr.mxu0 0.0
    %576 = vmatpush2.msra.mxu0 0.0
    %577 = vmatprep.subr.mxu0 0.0
    %578 = vmatpush2.msra.mxu0 0.0
    %579 = vmatprep.subr.mxu0 0.0
    %580 = vmatpush2.msra.mxu0 0.0
    %581 = vmatprep.subr.mxu0 0.0
    %582 = vmatpush2.msra.mxu0 0.0
    %583 = vmatprep.subr.mxu0 0.0
    %584 = vmatpush2.msra.mxu0 0.0
    %585 = vmatprep.subr.mxu0 0.0
    %586 = vmatpush2.msra.mxu0 0.0
    %587 = vmatprep.subr.mxu0 0.0
    %588 = vmatpush2.msra.mxu0 0.0
    %589 = vmatprep.subr.mxu0 0.0
    %590 = vmatpush2.msra.mxu0 0.0
    %591 = vmatprep.mubr.f32.mxu0 0.0
    %592 = vmatmul.mubr.f32.gmra.mxu0 %v509
    %v593 = vpop.f32.mrf.mxu0
    %v594 = vadd.f32 0.0, %v593
    %v595 = vpop.f32.mrf.mxu0
    %596 = vmatprep.mubr.f32.mxu0 0.0
    %597 = vmatmul.mubr.f32.gmra.mxu0 %v510
    %v598 = vpop.f32.mrf.mxu0
    %v599 = vadd.f32 0.0, %v598
    %v600 = vpop.f32.mrf.mxu0
    %601 = vdwg.mxu0
    %vm602 = vcmask 130048
    %603 = vst.msk [vmem:[#allocation5] sm:$0xff] %vm602, %v594
    %604 = vst.msk [vmem:[#allocation5 + $0x8] sm:$0xff] %vm602, %v599
    // Predicated region
    $region42: #{tpu_custom_call.1} parent=1 // pred_check
      _
    $region43: #{tpu_custom_call.1} parent=1 // pred_check_branch
      %606 = sbr.rel (0) target = $region45
    $region44: #{tpu_custom_call.1} parent=1 // pred_region
      %s608 = ssub.s32 256, 256
      %609 = vsyncadd [#allocation4], %s608
      %s610 = sshll.u32 [#allocation5], 4
      %s611 = int_to_ptr.vmem [resolvable:$true] %s610
      %616 = dma.vmem_to_hbm [thread:$0]  %s611, 256, %s9, [#allocation4], 128, 128, 8
    $region45: #{tpu_custom_call.1} parent=1 // pred_fallthru
      _
    // Predicated region
    $region46: #{tpu_custom_call.1} parent=1 // pred_check
      _
    $region47: #{tpu_custom_call.1} parent=1 // pred_check_branch
      %618 = sbr.rel (0) target = $region49
    $region48: #{tpu_custom_call.1} parent=1 // pred_region
      %619 = dma.done [#allocation4], 256
    $region49: #{tpu_custom_call.1} parent=1 // pred_fallthru
      _
    %620 = vsyncpa [#allocation3], 1
    %621 = vsyncpa [#allocation4], 1

</llo_original>
